<compile_context>
chip_gen: v5e
topology: v5e:2x2
jax: 0.10.0
libtpu: 0.0.40
codegen_flags: <defaults>
</compile_context>

<pallas_src>
import jax
import jax.numpy as jnp
from jax.experimental import pallas as pl
from jax.experimental.pallas import tpu as pltpu


_NEG_LARGE = -1e30  # drives padded logit columns to ~0 probability after softmax


def _round_up(x, m):
    return ((x + m - 1) // m) * m


def _mlp_softmax_kernel(x_ref, w1_ref, b1_ref, w2_ref, b2_ref, o_ref):
    # fc1: bf16 operands on the MXU, f32 accumulation; bias + ReLU in f32.
    h = jnp.dot(x_ref[...], w1_ref[...], preferred_element_type=jnp.float32)
    h = jnp.maximum(h + b1_ref[...], 0.0)

    # fc2: feed bf16 activations back into the MXU, accumulate f32.
    logits = jnp.dot(h.astype(w2_ref.dtype), w2_ref[...],
                     preferred_element_type=jnp.float32)
    logits = logits + b2_ref[...]          # padded classes get a huge negative bias

    # Numerically stable softmax over the class axis (padded lanes -> exp -> 0).
    m = jnp.max(logits, axis=1, keepdims=True)
    e = jnp.exp(logits - m)
    denom = jnp.sum(e, axis=1, keepdims=True)
    o_ref[...] = (e * pl.reciprocal(denom, approx=False)).astype(o_ref.dtype)


def anomaly_classifier_forward(x, w1, b1, w2, b2, *, tb_max=1024):
    """x: (B, D_in) f32; w1: (D_in, H); b1: (1, H); w2: (H, D_out); b2: (1, D_out).

    Weights use (in_features, out_features) layout (transposed vs. PyTorch) so the
    kernel computes plain x @ W + b on the MXU.
    """
    B, D_in = x.shape
    H = w1.shape[1]
    D_out = w2.shape[1]

    # --- lane-dense padding of feature dims (H, D_out -> multiples of 128) ---
    H_pad = _round_up(H, 128)
    D_out_pad = _round_up(D_out, 128)

    w1p = jnp.zeros((D_in, H_pad), jnp.float32).at[:, :H].set(w1)
    b1p = jnp.zeros((1, H_pad), jnp.float32).at[:, :H].set(b1)
    w2p = jnp.zeros((H_pad, D_out_pad), jnp.float32).at[:H, :D_out].set(w2)
    b2p = jnp.full((1, D_out_pad), _NEG_LARGE, jnp.float32).at[:, :D_out].set(b2)

    # --- batch tiling: grid over batch; tile sized well under v7x's 64 MiB VMEM ---
    B_pad = _round_up(B, 16)              # bf16 sublane-pack alignment
    TB = min(tb_max, B_pad)
    B_pad = _round_up(B_pad, TB)          # grid divides evenly
    xp = jnp.zeros((B_pad, D_in), jnp.float32).at[:B, :].set(x)

    # bf16 MXU operands (v6e/v7x fast path; v5e MXU still takes bf16). Biases stay f32.
    xb = xp.astype(jnp.bfloat16)
    w1b = w1p.astype(jnp.bfloat16)
    w2b = w2p.astype(jnp.bfloat16)

    grid = (B_pad // TB,)
    flops = 2 * B_pad * (D_in * H_pad + H_pad * D_out_pad)
    bytes_accessed = (xb.size * 2 + w1b.size * 2 + w2b.size * 2
                      + b1p.size * 4 + b2p.size * 4 + B_pad * D_out_pad * 4)
    cost = pl.CostEstimate(flops=flops,
                           transcendentals=B_pad * D_out_pad,
                           bytes_accessed=bytes_accessed)

    out = pl.pallas_call(
        _mlp_softmax_kernel,
        out_shape=jax.ShapeDtypeStruct((B_pad, D_out_pad), jnp.float32),
        grid=grid,
        in_specs=[
            pl.BlockSpec((TB, D_in), lambda i: (i, 0)),           # x: streamed per tile
            pl.BlockSpec((D_in, H_pad), lambda i: (0, 0)),        # w1: resident
            pl.BlockSpec((1, H_pad), lambda i: (0, 0)),           # b1: resident
            pl.BlockSpec((H_pad, D_out_pad), lambda i: (0, 0)),   # w2: resident
            pl.BlockSpec((1, D_out_pad), lambda i: (0, 0)),       # b2: resident
        ],
        out_specs=pl.BlockSpec((TB, D_out_pad), lambda i: (i, 0)),
        compiler_params=pltpu.CompilerParams(
            dimension_semantics=("parallel",)),
        cost_estimate=cost,
    )(xb, w1b, b1p, w2b, b2p)

    # Strip batch/class padding outside the kernel.
    return out[:B, :D_out]


def init_params(key, input_size, hidden_size, output_size):
    """Deterministic init mimicking PyTorch nn.Linear (uniform +-1/sqrt(fan_in))."""
    k1, k2, k3, k4 = jax.random.split(key, 4)
    bound1 = 1.0 / (input_size ** 0.5)
    bound2 = 1.0 / (hidden_size ** 0.5)
    w1 = jax.random.uniform(k1, (input_size, hidden_size), jnp.float32, -bound1, bound1)
    b1 = jax.random.uniform(k2, (1, hidden_size), jnp.float32, -bound1, bound1)
    w2 = jax.random.uniform(k3, (hidden_size, output_size), jnp.float32, -bound2, bound2)
    b2 = jax.random.uniform(k4, (1, output_size), jnp.float32, -bound2, bound2)
    return w1, b1, w2, b2


if __name__ == "__main__":
    batch = 8
    input_size = 32
    hidden_size = 64
    output_size = 16

    key = jax.random.PRNGKey(0)
    kx, kp = jax.random.split(key)
    x = jax.random.normal(kx, (batch, input_size), dtype=jnp.float32)
    w1, b1, w2, b2 = init_params(kp, input_size, hidden_size, output_size)

    out = anomaly_classifier_forward(x, w1, b1, w2, b2)
    out = jax.block_until_ready(out)

    # Reference in plain JAX with the same bf16 MXU operands / f32 accumulation.
    xb = x.astype(jnp.bfloat16)
    w1b = w1.astype(jnp.bfloat16)
    w2b = w2.astype(jnp.bfloat16)
    h_ref = jnp.maximum(
        jnp.dot(xb, w1b, preferred_element_type=jnp.float32) + b1, 0.0)
    logits_ref = jnp.dot(
        h_ref.astype(jnp.bfloat16), w2b, preferred_element_type=jnp.float32) + b2
    ref = jax.nn.softmax(logits_ref, axis=1)

    assert out.shape == (batch, output_size), f"bad output shape {out.shape}"
    assert jnp.allclose(out, ref, atol=2e-3, rtol=2e-3), "mismatch vs reference"
    assert jnp.allclose(jnp.sum(out, axis=1), 1.0, atol=1e-4), "softmax rows must sum to 1"

    print("KERNEL_OK")
</pallas_src>

<mosaic_0001>
module attributes {stable_mosaic.version = 11 : i64} {
  func.func @_mlp_softmax_kernel(%arg0: i32, %arg1: memref<16x32xbf16, #tpu.memory_space<vmem>>, %arg2: memref<32x128xbf16, #tpu.memory_space<vmem>>, %arg3: memref<1x128xf32, #tpu.memory_space<vmem>>, %arg4: memref<128x128xbf16, #tpu.memory_space<vmem>>, %arg5: memref<1x128xf32, #tpu.memory_space<vmem>>, %arg6: memref<16x128xf32, #tpu.memory_space<vmem>>) attributes {dimension_semantics = [#tpu.dimension_semantics<parallel>], iteration_bounds = array<i64: 1>, scalar_prefetch = 0 : i64, scratch_operands = 0 : i64, tpu.core_type = #tpu.core_type<tc>, window_params = [{transform_indices = @transform_0, window_bounds = array<i64: 16, 32>}, {pipeline_mode = #tpu.pipeline_mode<synchronous>, transform_indices = @transform_1, window_bounds = array<i64: 32, 128>}, {pipeline_mode = #tpu.pipeline_mode<synchronous>, transform_indices = @transform_2, window_bounds = array<i64: 1, 128>}, {pipeline_mode = #tpu.pipeline_mode<synchronous>, transform_indices = @transform_3, window_bounds = array<i64: 128, 128>}, {pipeline_mode = #tpu.pipeline_mode<synchronous>, transform_indices = @transform_4, window_bounds = array<i64: 1, 128>}, {transform_indices = @transform_5, window_bounds = array<i64: 16, 128>}]} {
    %c0 = arith.constant 0 : index
    %c0_0 = arith.constant 0 : index
    %0 = vector.load %arg1[%c0, %c0_0] : memref<16x32xbf16, #tpu.memory_space<vmem>>, vector<16x32xbf16>
    %c0_1 = arith.constant 0 : index
    %c0_2 = arith.constant 0 : index
    %1 = vector.load %arg2[%c0_1, %c0_2] : memref<32x128xbf16, #tpu.memory_space<vmem>>, vector<32x128xbf16>
    %cst = arith.constant dense<0.000000e+00> : vector<16x128xf32>
    %2 = tpu.matmul %0, %1, %cst {dimension_numbers = #tpu.dot_dimension_numbers<[1], [0], [0], [1], [0, 0, 1, 1], [], []>} : vector<16x32xbf16>, vector<32x128xbf16>, vector<16x128xf32> -> vector<16x128xf32>
    %c0_3 = arith.constant 0 : index
    %c0_4 = arith.constant 0 : index
    %3 = vector.load %arg3[%c0_3, %c0_4] : memref<1x128xf32, #tpu.memory_space<vmem>>, vector<1x128xf32>
    %4 = vector.broadcast %3 : vector<1x128xf32> to vector<16x128xf32>
    %5 = arith.addf %2, %4 : vector<16x128xf32>
    %cst_5 = arith.constant 0.000000e+00 : f32
    %6 = vector.broadcast %cst_5 : f32 to vector<16x128xf32>
    %7 = arith.maximumf %5, %6 : vector<16x128xf32>
    %8 = arith.truncf %7 : vector<16x128xf32> to vector<16x128xbf16>
    %c0_6 = arith.constant 0 : index
    %c0_7 = arith.constant 0 : index
    %9 = vector.load %arg4[%c0_6, %c0_7] : memref<128x128xbf16, #tpu.memory_space<vmem>>, vector<128x128xbf16>
    %cst_8 = arith.constant dense<0.000000e+00> : vector<16x128xf32>
    %10 = tpu.matmul %8, %9, %cst_8 {dimension_numbers = #tpu.dot_dimension_numbers<[1], [0], [0], [1], [0, 0, 1, 1], [], []>} : vector<16x128xbf16>, vector<128x128xbf16>, vector<16x128xf32> -> vector<16x128xf32>
    %c0_9 = arith.constant 0 : index
    %c0_10 = arith.constant 0 : index
    %11 = vector.load %arg5[%c0_9, %c0_10] : memref<1x128xf32, #tpu.memory_space<vmem>>, vector<1x128xf32>
    %12 = vector.broadcast %11 : vector<1x128xf32> to vector<16x128xf32>
    %13 = arith.addf %10, %12 : vector<16x128xf32>
    %cst_11 = arith.constant dense<0xFF800000> : vector<16xf32>
    %14 = vector.multi_reduction <maximumf>, %13, %cst_11 [1] : vector<16x128xf32> to vector<16xf32>
    %15 = vector.shape_cast %14 : vector<16xf32> to vector<16x1xf32>
    %16 = vector.broadcast %15 : vector<16x1xf32> to vector<16x128xf32>
    %17 = arith.subf %13, %16 : vector<16x128xf32>
    %18 = math.exp %17 : vector<16x128xf32>
    %cst_12 = arith.constant dense<0.000000e+00> : vector<16xf32>
    %19 = vector.multi_reduction <add>, %18, %cst_12 [1] : vector<16x128xf32> to vector<16xf32>
    %20 = vector.shape_cast %19 : vector<16xf32> to vector<16x1xf32>
    %21 = tpu.reciprocal %20 : vector<16x1xf32> -> vector<16x1xf32>
    %22 = vector.broadcast %21 : vector<16x1xf32> to vector<16x128xf32>
    %23 = arith.mulf %18, %22 : vector<16x128xf32>
    %c0_13 = arith.constant 0 : index
    %c0_14 = arith.constant 0 : index
    %24 = vector.load %arg6[%c0_13, %c0_14] : memref<16x128xf32, #tpu.memory_space<vmem>>, vector<16x128xf32>
    tpu.vector_store %arg6[%c0_13, %c0_14], %23 {strides = array<i32>} : memref<16x128xf32, #tpu.memory_space<vmem>>, vector<16x128xf32>,
    return
  }
  func.func @transform_0(%arg0: i32) -> (i32, i32) {
    %c0_i32 = arith.constant 0 : i32
    %c0_i32_0 = arith.constant 0 : i32
    return %arg0, %c0_i32 : i32, i32
  }
  func.func @transform_1(%arg0: i32) -> (i32, i32) {
    %c0_i32 = arith.constant 0 : i32
    %c0_i32_0 = arith.constant 0 : i32
    %c0_i32_1 = arith.constant 0 : i32
    return %c0_i32, %c0_i32_0 : i32, i32
  }
  func.func @transform_2(%arg0: i32) -> (i32, i32) {
    %c0_i32 = arith.constant 0 : i32
    %c0_i32_0 = arith.constant 0 : i32
    %c0_i32_1 = arith.constant 0 : i32
    return %c0_i32, %c0_i32_0 : i32, i32
  }
  func.func @transform_3(%arg0: i32) -> (i32, i32) {
    %c0_i32 = arith.constant 0 : i32
    %c0_i32_0 = arith.constant 0 : i32
    %c0_i32_1 = arith.constant 0 : i32
    return %c0_i32, %c0_i32_0 : i32, i32
  }
  func.func @transform_4(%arg0: i32) -> (i32, i32) {
    %c0_i32 = arith.constant 0 : i32
    %c0_i32_0 = arith.constant 0 : i32
    %c0_i32_1 = arith.constant 0 : i32
    return %c0_i32, %c0_i32_0 : i32, i32
  }
  func.func @transform_5(%arg0: i32) -> (i32, i32) {
    %c0_i32 = arith.constant 0 : i32
    %c0_i32_0 = arith.constant 0 : i32
    return %arg0, %c0_i32 : i32, i32
  }
}

</mosaic_0001>

<llo_original>
// kernel: tpu_custom_call.1
$region0: #{tpu_custom_call.1}
  #allocation0 [shape = 'u32[]', space=smem, size = 0x4, offset = 0x4, fixed_abs, tag = 'smem constant byte address 0x4 - core index']
  #allocation1 [shape = 'u32[72,128]{1,0:T(1,128)}', space=vmem, size = 0x9000, scoped, tag = 'internal scratch']
  %s0 = inlined_call_operand.hbm [shape: bf16[16,32], index: 0, kind: input, shape index: {}]
  %s1 = inlined_call_operand.hbm [shape: bf16[32,128], index: 1, kind: input, shape index: {}]
  %s2 = inlined_call_operand.vmem [shape: f32[1,128], index: 2, kind: input, shape index: {}]
  %s3 = inlined_call_operand.hbm [shape: bf16[128,128], index: 3, kind: input, shape index: {}]
  %s4 = inlined_call_operand.vmem [shape: f32[1,128], index: 4, kind: input, shape index: {}]
  %s5 = inlined_call_operand.hbm [shape: f32[16,128], index: 5, kind: output, shape index: {}]
  %s6 = sld [smem:[#allocation0]]
  $region42: #{tpu_custom_call.1} parent=0
    _
  %s8 = ssub.s32 1, %s6
  %s9 = scalar_select 0, %s8, %s6
  $region1: #{tpu_custom_call.1} parent=0
    #allocation2 [shape = 'u8[4096]{0}', space=vmem, size = 0x1000, scoped, tag = 'input window, operand 0, single buffered']
    #allocation3 [shape = 's32[1]{0}', space=sflag, size = 0x4, scoped, tag = 'scoped memory for tpu_custom_call.1']
    #allocation4 [shape = 's32[1]{0}', space=sflag, size = 0x4, scoped, tag = 'scoped memory for tpu_custom_call.1']
    #allocation5 [shape = 'u8[8192]{0}', space=vmem, size = 0x2000, scoped, tag = 'input window, operand 1, single buffered']
    #allocation6 [shape = 's32[1]{0}', space=sflag, size = 0x4, scoped, tag = 'scoped memory for tpu_custom_call.1']
    #allocation7 [shape = 'u8[32768]{0}', space=vmem, size = 0x8000, scoped, tag = 'input window, operand 3, single buffered']
    #allocation8 [shape = 'u8[8192]{0}', space=vmem, size = 0x2000, scoped, tag = 'output window, operand 0, single buffered']
    %10 = vsyncpa [#allocation3], 0
    %11 = vsyncpa [#allocation6], 0
    %12 = vsyncpa [#allocation4], 0
    // Predicated region
    $region2: #{tpu_custom_call.1} parent=1 // pred_check
      _
    $region3: #{tpu_custom_call.1} parent=1 // pred_check_branch
      %14 = sbr.rel (0) target = $region5
    $region4: #{tpu_custom_call.1} parent=1 // pred_region
      %16 = vsyncadd [#allocation3], 0
      %s17 = sshll.u32 %s0, 4
      %s18 = int_to_ptr.hbm [resolvable:$true] %s17
      %s19 = sshll.u32 [#allocation2], 4
      %s20 = int_to_ptr.vmem [resolvable:$true] %s19
      %25 = dma.hbm_to_vmem [thread:$0]  %s18, 128, %s20, [#allocation3], 64, 64, 4
    $region5: #{tpu_custom_call.1} parent=1 // pred_fallthru
      _
    // Predicated region
    $region6: #{tpu_custom_call.1} parent=1 // pred_check
      _
    $region7: #{tpu_custom_call.1} parent=1 // pred_check_branch
      %27 = sbr.rel (0) target = $region9
    $region8: #{tpu_custom_call.1} parent=1 // pred_region
      %29 = vsyncadd [#allocation6], 0
      %s30 = sshll.u32 %s1, 4
      %s31 = int_to_ptr.hbm [resolvable:$true] %s30
      %s32 = sshll.u32 [#allocation5], 4
      %s33 = int_to_ptr.vmem [resolvable:$true] %s32
      %38 = dma.hbm_to_vmem [thread:$0]  %s31, 256, %s33, [#allocation6], 64, 64, 4
    $region9: #{tpu_custom_call.1} parent=1 // pred_fallthru
      _
    // Predicated region
    $region10: #{tpu_custom_call.1} parent=1 // pred_check
      _
    $region11: #{tpu_custom_call.1} parent=1 // pred_check_branch
      %40 = sbr.rel (0) target = $region13
    $region12: #{tpu_custom_call.1} parent=1 // pred_region
      _
    $region13: #{tpu_custom_call.1} parent=1 // pred_fallthru
      _
    // Predicated region
    $region14: #{tpu_custom_call.1} parent=1 // pred_check
      _
    $region15: #{tpu_custom_call.1} parent=1 // pred_check_branch
      %42 = sbr.rel (0) target = $region17
    $region16: #{tpu_custom_call.1} parent=1 // pred_region
      %44 = vsyncadd [#allocation6], 0
      %s45 = sshll.u32 %s3, 4
      %s46 = int_to_ptr.hbm [resolvable:$true] %s45
      %s47 = sshll.u32 [#allocation7], 4
      %s48 = int_to_ptr.vmem [resolvable:$true] %s47
      %53 = dma.hbm_to_vmem [thread:$0]  %s46, 1024, %s48, [#allocation6], 64, 64, 4
    $region17: #{tpu_custom_call.1} parent=1 // pred_fallthru
      _
    // Predicated region
    $region18: #{tpu_custom_call.1} parent=1 // pred_check
      _
    $region19: #{tpu_custom_call.1} parent=1 // pred_check_branch
      %55 = sbr.rel (0) target = $region21
    $region20: #{tpu_custom_call.1} parent=1 // pred_region
      _
    $region21: #{tpu_custom_call.1} parent=1 // pred_fallthru
      _
    // Predicated region
    $region22: #{tpu_custom_call.1} parent=1 // pred_check
      _
    $region23: #{tpu_custom_call.1} parent=1 // pred_check_branch
      %57 = sbr.rel (0) target = $region25
    $region24: #{tpu_custom_call.1} parent=1 // pred_region
      %59 = dma.done [#allocation3], 128
    $region25: #{tpu_custom_call.1} parent=1 // pred_fallthru
      _
    // Predicated region
    $region26: #{tpu_custom_call.1} parent=1 // pred_check
      _
    $region27: #{tpu_custom_call.1} parent=1 // pred_check_branch
      %61 = sbr.rel (0) target = $region29
    $region28: #{tpu_custom_call.1} parent=1 // pred_region
      %63 = dma.done [#allocation6], 256
    $region29: #{tpu_custom_call.1} parent=1 // pred_fallthru
      _
    // Predicated region
    $region30: #{tpu_custom_call.1} parent=1 // pred_check
      _
    $region31: #{tpu_custom_call.1} parent=1 // pred_check_branch
      %65 = sbr.rel (0) target = $region33
    $region32: #{tpu_custom_call.1} parent=1 // pred_region
      %67 = dma.done [#allocation6], 1024
    $region33: #{tpu_custom_call.1} parent=1 // pred_fallthru
      _
    %v69 = vld [vmem:[#allocation2] sm:$0xf]
    %v70 = vld [vmem:[#allocation2 + $0x4] sm:$0xf]
    %v71 = vld [vmem:[#allocation5] sm:$0xf]
    %v72 = vld [vmem:[#allocation5 + $0x4] sm:$0xf]
    %v73 = vld [vmem:[#allocation5 + $0x8] sm:$0xf]
    %v74 = vld [vmem:[#allocation5 + $0xc] sm:$0xf]
    %v75 = vld [vmem:[%s2] sm:$0x1]
    %v77 = vperm.slane %v75, 0
    %v81 = vunpack.c.l.b16 %v69
    %v82 = vunpack.c.l.b16 %v70
    %v83 = vpack.c.b16 %v82, %v81
    %v88 = vunpack.c.l.b16 %v71
    %v89 = vunpack.c.l.b16 %v72
    %v90 = vunpack.c.l.b16 %v73
    %v91 = vunpack.c.l.b16 %v74
    %v92 = vpack.c.b16 %v89, %v88
    %v93 = vpack.c.b16 %v91, %v90
    %vm96 = vcmask 261120
    %v98 = vsel %vm96, %v83, 0
    %100 = vmatpush.bf16.msra.mxu0 0
    %101 = vmatpush.bf16.msra.mxu0 0
    %102 = vmatpush.bf16.msra.mxu0 0
    %103 = vmatpush.bf16.msra.mxu0 0
    %104 = vmatpush.bf16.msra.mxu0 0
    %105 = vmatpush.bf16.msra.mxu0 0
    %106 = vmatpush.bf16.msra.mxu0 %v93
    %107 = vmatpush.bf16.msra.mxu0 %v92
    %108 = vmatmul.bf16.gmra.mxu0 %v98
    %v109 = vpop.f32.mrf.mxu0
    %v110 = vadd.f32 %v77, %v109
    %v111 = vpop.f32.mrf.mxu0
    %v112 = vadd.f32 %v77, %v111
    %113 = vdwg.mxu0
    %v114 = vmax.f32 %v110, 0.0
    %v115 = vmax.f32 %v112, 0.0
    %v116 = vpack.c.bf16 %v115, %v114
    %v117 = vld [vmem:[#allocation7] sm:$0xf]
    %v118 = vld [vmem:[#allocation7 + $0x4] sm:$0xf]
    %v119 = vld [vmem:[#allocation7 + $0x8] sm:$0xf]
    %v120 = vld [vmem:[#allocation7 + $0xc] sm:$0xf]
    %v121 = vld [vmem:[#allocation7 + $0x10] sm:$0xf]
    %v122 = vld [vmem:[#allocation7 + $0x14] sm:$0xf]
    %v123 = vld [vmem:[#allocation7 + $0x18] sm:$0xf]
    %v124 = vld [vmem:[#allocation7 + $0x1c] sm:$0xf]
    %v125 = vld [vmem:[#allocation7 + $0x20] sm:$0xf]
    %v126 = vld [vmem:[#allocation7 + $0x24] sm:$0xf]
    %v127 = vld [vmem:[#allocation7 + $0x28] sm:$0xf]
    %v128 = vld [vmem:[#allocation7 + $0x2c] sm:$0xf]
    %v129 = vld [vmem:[#allocation7 + $0x30] sm:$0xf]
    %v130 = vld [vmem:[#allocation7 + $0x34] sm:$0xf]
    %v131 = vld [vmem:[#allocation7 + $0x38] sm:$0xf]
    %v132 = vld [vmem:[#allocation7 + $0x3c] sm:$0xf]
    %v133 = vld [vmem:[%s4] sm:$0x1]
    %v135 = vperm.slane %v133, 0
    %v153 = vunpack.c.l.b16 %v117
    %v154 = vunpack.c.l.b16 %v118
    %v155 = vunpack.c.l.b16 %v119
    %v156 = vunpack.c.l.b16 %v120
    %v157 = vunpack.c.l.b16 %v121
    %v158 = vunpack.c.l.b16 %v122
    %v159 = vunpack.c.l.b16 %v123
    %v160 = vunpack.c.l.b16 %v124
    %v161 = vunpack.c.l.b16 %v125
    %v162 = vunpack.c.l.b16 %v126
    %v163 = vunpack.c.l.b16 %v127
    %v164 = vunpack.c.l.b16 %v128
    %v165 = vunpack.c.l.b16 %v129
    %v166 = vunpack.c.l.b16 %v130
    %v167 = vunpack.c.l.b16 %v131
    %v168 = vunpack.c.l.b16 %v132
    %v169 = vpack.c.b16 %v154, %v153
    %v170 = vpack.c.b16 %v156, %v155
    %v171 = vpack.c.b16 %v158, %v157
    %v172 = vpack.c.b16 %v160, %v159
    %v173 = vpack.c.b16 %v162, %v161
    %v174 = vpack.c.b16 %v164, %v163
    %v175 = vpack.c.b16 %v166, %v165
    %v176 = vpack.c.b16 %v168, %v167
    %185 = vmatpush.bf16.msra.mxu0 %v176
    %186 = vmatpush.bf16.msra.mxu0 %v175
    %187 = vmatpush.bf16.msra.mxu0 %v174
    %188 = vmatpush.bf16.msra.mxu0 %v173
    %189 = vmatpush.bf16.msra.mxu0 %v172
    %190 = vmatpush.bf16.msra.mxu0 %v171
    %191 = vmatpush.bf16.msra.mxu0 %v170
    %192 = vmatpush.bf16.msra.mxu0 %v169
    %193 = vmatmul.bf16.gmra.mxu0 %v116
    %v194 = vpop.f32.mrf.mxu0
    %v195 = vadd.f32 %v135, %v194
    %v196 = vpop.f32.mrf.mxu0
    %v197 = vadd.f32 %v135, %v196
    %198 = vdwg.mxu0
    %199 = vmax.xlane.f32.xlu0 %v195
    %v200 = vpop.xlane.xlu0 %199
    %201 = vmax.xlane.f32.xlu0 %v197
    %v202 = vpop.xlane.xlu0 %201
    %v203 = vsub.f32 %v195, %v200
    %v204 = vsub.f32 %v197, %v202
    %v205 = vmul.f32 %v203, 1.442695
    %v206 = vpow.pop %v205
    %v207 = vmul.f32 %v204, 1.442695
    %v208 = vpow.pop %v207
    %209 = vadd.xlane.f32.xlu0 %v206
    %v210 = vpop.xlane.xlu0 %209
    %211 = vadd.xlane.f32.xlu0 %v208
    %v212 = vpop.xlane.xlu0 %211
    %v213 = vrcp.pop %v210
    %v214 = vmul.f32 %v210, %v213
    %v215 = vsub.f32 1.0, %v214
    %v216 = vmul.f32 %v213, %v215
    %v217 = vadd.f32 %v213, %v216
    %vm218 = vweird.f32 %v210
    %vm219 = vweird.f32 %v213
    %vm220 = vmor %vm218, %vm219
    %v221 = vsel %vm220, %v213, %v217
    %v222 = vand.u32 2147483647, %v210
    %vm223 = vcmp.eq.f32.partialorder %v222, 8.507059e+37
    %v224 = vand.u32 %v210, 2147483648
    %v225 = vor.u32 1.1754944e-38, %v224
    %v226 = vsel %vm223, %v225, %v221
    %v227 = vrcp.pop %v212
    %v228 = vmul.f32 %v212, %v227
    %v229 = vsub.f32 1.0, %v228
    %v230 = vmul.f32 %v227, %v229
    %v231 = vadd.f32 %v227, %v230
    %vm232 = vweird.f32 %v212
    %vm233 = vweird.f32 %v227
    %vm234 = vmor %vm232, %vm233
    %v235 = vsel %vm234, %v227, %v231
    %v236 = vand.u32 2147483647, %v212
    %vm237 = vcmp.eq.f32.partialorder %v236, 8.507059e+37
    %v238 = vand.u32 %v212, 2147483648
    %v239 = vor.u32 1.1754944e-38, %v238
    %v240 = vsel %vm237, %v239, %v235
    %v241 = vmul.f32 %v206, %v226
    %v242 = vmul.f32 %v208, %v240
    %243 = vst [vmem:[#allocation8] sm:$0xff] %v241
    %244 = vst [vmem:[#allocation8 + $0x8] sm:$0xff] %v242
    // Predicated region
    $region34: #{tpu_custom_call.1} parent=1 // pred_check
      _
    $region35: #{tpu_custom_call.1} parent=1 // pred_check_branch
      %246 = sbr.rel (0) target = $region37
    $region36: #{tpu_custom_call.1} parent=1 // pred_region
      %248 = vsyncadd [#allocation4], 0
      %s249 = sshll.u32 [#allocation8], 4
      %s250 = int_to_ptr.vmem [resolvable:$true] %s249
      %s251 = sshll.u32 %s5, 4
      %s252 = int_to_ptr.hbm [resolvable:$true] %s251
      %257 = dma.vmem_to_hbm [thread:$0]  %s250, 256, %s252, [#allocation4], 128, 128, 8
    $region37: #{tpu_custom_call.1} parent=1 // pred_fallthru
      _
    // Predicated region
    $region38: #{tpu_custom_call.1} parent=1 // pred_check
      _
    $region39: #{tpu_custom_call.1} parent=1 // pred_check_branch
      %259 = sbr.rel (0) target = $region41
    $region40: #{tpu_custom_call.1} parent=1 // pred_region
      %261 = dma.done [#allocation4], 256
    $region41: #{tpu_custom_call.1} parent=1 // pred_fallthru
      _
    %262 = vsyncpa [#allocation3], 1
    %263 = vsyncpa [#allocation6], 1
    %264 = vsyncpa [#allocation4], 1

</llo_original>
